<compile_context>
chip_gen: v6e
topology: v6e:2x2x1
jax: 0.10.0
libtpu: 0.0.40
codegen_flags: <defaults>
</compile_context>

<pallas_src>
import functools

import jax
import jax.numpy as jnp
from jax.experimental import pallas as pl
from jax.experimental.pallas import tpu as pltpu

BN_EPS = 1e-5


# ---------------------------------------------------------------------------
# Fused Pallas kernel: 5x (aggregate + MLP)  ->  pool  ->  head MLP
# All matmul operands bf16, f32 MXU accumulation, f32 biases.
# ---------------------------------------------------------------------------
def _gin_fused_kernel(a_ref, p_ref, x_ref,
                      w1_ref, b1_ref, w2_ref, b2_ref,      # stacked per-layer [L, ...]
                      hw1_ref, hb1_ref, hw2_ref, hb2_ref,  # head
                      o_ref):
    a = a_ref[...]                       # [Np, Np] bf16 adjacency (+I), exact counts
    num_layers = w1_ref.shape[0]

    def layer(l, h):                     # h: [Np, D] bf16, resident in VMEM/vregs
        # (1+eps)*x_i + sum_j x_j  ==  A_hat @ h   (bf16 MXU, f32 acc)
        agg = jnp.dot(a, h, preferred_element_type=jnp.float32)          # [Np, D] f32
        # Linear1 with BatchNorm folded in, then ReLU (bf16 operands, f32 acc/bias).
        t = jnp.dot(agg.astype(jnp.bfloat16), w1_ref[l],
                    preferred_element_type=jnp.float32) + b1_ref[l]
        t = jnp.maximum(t, 0.0)
        # Linear2 + ReLU.
        t = jnp.dot(t.astype(jnp.bfloat16), w2_ref[l],
                    preferred_element_type=jnp.float32) + b2_ref[l]
        return jnp.maximum(t, 0.0).astype(jnp.bfloat16)

    h = jax.lax.fori_loop(0, num_layers, layer, x_ref[...])

    # global_add_pool: P [Gp, Np] @ h [Np, D] -> [Gp, D]  (bf16 MXU, f32 acc).
    pooled = jnp.dot(p_ref[...], h, preferred_element_type=jnp.float32)
    # lin1 + relu ; dropout(p=0.5, training=False) is identity ; lin2.
    t = jnp.maximum(
        jnp.dot(pooled.astype(jnp.bfloat16), hw1_ref[...],
                preferred_element_type=jnp.float32) + hb1_ref[...], 0.0)
    o_ref[...] = (jnp.dot(t.astype(jnp.bfloat16), hw2_ref[...],
                          preferred_element_type=jnp.float32) + hb2_ref[...])


# ---------------------------------------------------------------------------
# Host-side parameter prep: BN folding, zero padding, per-layer stacking
# ---------------------------------------------------------------------------
def _round_up(v, m):
    return ((v + m - 1) // m) * m


def _pad2(a, rows, cols):
    return jnp.pad(a, ((0, rows - a.shape[0]), (0, cols - a.shape[1])))


def _fold_bn(p):
    scale = p["gamma"] * jax.lax.rsqrt(p["var"] + BN_EPS)     # [1, H]
    w1f = p["w1"] * scale                                     # [Din, H]
    b1f = (p["b1"] - p["mean"]) * scale + p["beta"]           # [1, H]
    return w1f, b1f


def _prepare_conv_params(conv_params, d_pad):
    w1s, b1s, w2s, b2s = [], [], [], []
    for p in conv_params:
        w1f, b1f = _fold_bn(p)
        w1s.append(_pad2(w1f, d_pad, d_pad).astype(jnp.bfloat16))   # bf16 weights
        b1s.append(_pad2(b1f, 1, d_pad))                            # f32 biases
        w2s.append(_pad2(p["w2"], d_pad, d_pad).astype(jnp.bfloat16))
        b2s.append(_pad2(p["b2"], 1, d_pad))
    return jnp.stack(w1s), jnp.stack(b1s), jnp.stack(w2s), jnp.stack(b2s)


def _vmem_limit_bytes(resident_bytes):
    """Per-generation scoped-VMEM limit: physical capacity minus ~15% headroom,
    but not over-reserved for tiny problems."""
    try:
        cap = int(pltpu.get_tpu_info().vmem_capacity_bytes)
    except Exception:
        cap = 128 * 1024 * 1024
    limit = int(0.85 * cap)
    want = max(4 * resident_bytes, 32 * 1024 * 1024)
    return int(min(limit, want))


# ---------------------------------------------------------------------------
# Full model forward (glue in plain JAX, everything hot in one Pallas call)
# ---------------------------------------------------------------------------
def gin_forward(x, edge_index, batch, conv_params, head_params, num_graphs):
    n, c_in = x.shape
    hidden = conv_params[0]["w2"].shape[0]
    out_c = head_params["w2"].shape[1]
    num_layers = len(conv_params)

    d_pad = _round_up(max(c_in, hidden), 128)      # lane-dense feature width
    n_pad = _round_up(n, 128)                      # lane/sublane-dense node count
    g_pad = _round_up(num_graphs, 8)               # sublane-dense graph rows
    out_pad = _round_up(out_c, 128)                # lane-dense output stores

    # Dense A_hat = A + (1+eps)*I with eps = 0, built directly in bf16
    # (scatter-add of 1.0 is exact for counts < 256).
    src, dst = edge_index[0], edge_index[1]
    a_hat = jnp.zeros((n_pad, n_pad), jnp.bfloat16).at[dst, src].add(1.0)
    a_hat = a_hat.at[jnp.arange(n), jnp.arange(n)].add(1.0)

    # Pooling matrix P[g, n] = 1 if batch[n] == g (0/1 exact in bf16).
    pool = (batch[None, :] == jnp.arange(g_pad)[:, None]).astype(jnp.bfloat16)
    pool = jnp.pad(pool, ((0, 0), (0, n_pad - n)))

    x_p = _pad2(x.astype(jnp.bfloat16), n_pad, d_pad)

    w1s, b1s, w2s, b2s = _prepare_conv_params(conv_params, d_pad)
    hw1 = _pad2(head_params["w1"], d_pad, d_pad).astype(jnp.bfloat16)
    hb1 = _pad2(head_params["b1"], 1, d_pad)
    hw2 = _pad2(head_params["w2"], d_pad, out_pad).astype(jnp.bfloat16)
    hb2 = _pad2(head_params["b2"], 1, out_pad)

    args = (a_hat, pool, x_p, w1s, b1s, w2s, b2s, hw1, hb1, hw2, hb2)

    flops = (num_layers * (2 * n_pad * n_pad * d_pad + 4 * n_pad * d_pad * d_pad)
             + 2 * g_pad * n_pad * d_pad
             + 2 * g_pad * d_pad * d_pad
             + 2 * g_pad * d_pad * out_pad)
    bytes_accessed = int(sum(a.size * a.dtype.itemsize for a in args)
                         + g_pad * out_pad * 4)
    cost = pl.CostEstimate(flops=int(flops), transcendentals=0,
                           bytes_accessed=bytes_accessed)
    vmem_limit = _vmem_limit_bytes(bytes_accessed)

    out = pl.pallas_call(
        _gin_fused_kernel,
        out_shape=jax.ShapeDtypeStruct((g_pad, out_pad), jnp.float32),
        in_specs=[pl.BlockSpec(memory_space=pltpu.MemorySpace.VMEM)] * len(args),
        out_specs=pl.BlockSpec(memory_space=pltpu.MemorySpace.VMEM),
        cost_estimate=cost,
        compiler_params=pltpu.CompilerParams(vmem_limit_bytes=vmem_limit),
    )(*args)

    return out[:num_graphs, :out_c]


# ---------------------------------------------------------------------------
# Parameter construction (deterministic, synthetic, torch-layout semantics)
# ---------------------------------------------------------------------------
def _linear_params(key, d_in, d_out):
    kw, kb = jax.random.split(key)
    bound = 1.0 / jnp.sqrt(d_in)
    # stored as [in, out] so that x @ W matches torch's x @ W_torch.T
    w = jax.random.uniform(kw, (d_in, d_out), jnp.float32, -bound, bound)
    b = jax.random.uniform(kb, (1, d_out), jnp.float32, -bound, bound)
    return w, b


def make_gin_params(key, in_channels, hidden, out_channels):
    keys = jax.random.split(key, 12)
    convs = []
    d_in = in_channels
    for i in range(5):
        w1, b1 = _linear_params(keys[2 * i], d_in, hidden)
        w2, b2 = _linear_params(keys[2 * i + 1], hidden, hidden)
        convs.append(dict(
            w1=w1, b1=b1, w2=w2, b2=b2,
            gamma=jnp.ones((1, hidden), jnp.float32),
            beta=jnp.zeros((1, hidden), jnp.float32),
            mean=jnp.zeros((1, hidden), jnp.float32),   # BatchNorm1d running_mean init
            var=jnp.ones((1, hidden), jnp.float32),     # BatchNorm1d running_var init
        ))
        d_in = hidden
    lw1, lb1 = _linear_params(keys[10], hidden, hidden)
    lw2, lb2 = _linear_params(keys[11], hidden, out_channels)
    head = dict(w1=lw1, b1=lb1, w2=lw2, b2=lb2)
    return convs, head


# ---------------------------------------------------------------------------
# Pure-JAX reference with the SAME numerics as the kernel (bf16 operands for
# every matmul, f32 accumulation, f32 biases, BN folded into Linear1) so the
# tolerance check stays meaningful.
# ---------------------------------------------------------------------------
def gin_forward_ref(x, edge_index, batch, conv_params, head_params, num_graphs):
    n = x.shape[0]
    src, dst = edge_index[0], edge_index[1]
    a_hat = jnp.zeros((n, n), jnp.bfloat16).at[dst, src].add(1.0)
    a_hat = a_hat.at[jnp.arange(n), jnp.arange(n)].add(1.0)
    pool = (batch[None, :] == jnp.arange(num_graphs)[:, None]).astype(jnp.bfloat16)

    h = x.astype(jnp.bfloat16)
    for p in conv_params:
        w1f, b1f = _fold_bn(p)
        agg = jnp.dot(a_hat, h, preferred_element_type=jnp.float32)
        t = jnp.dot(agg.astype(jnp.bfloat16), w1f.astype(jnp.bfloat16),
                    preferred_element_type=jnp.float32) + b1f
        t = jnp.maximum(t, 0.0)
        t = jnp.dot(t.astype(jnp.bfloat16), p["w2"].astype(jnp.bfloat16),
                    preferred_element_type=jnp.float32) + p["b2"]
        h = jnp.maximum(t, 0.0).astype(jnp.bfloat16)

    pooled = jnp.dot(pool, h, preferred_element_type=jnp.float32)
    t = jnp.maximum(
        jnp.dot(pooled.astype(jnp.bfloat16), head_params["w1"].astype(jnp.bfloat16),
                preferred_element_type=jnp.float32) + head_params["b1"], 0.0)
    return (jnp.dot(t.astype(jnp.bfloat16), head_params["w2"].astype(jnp.bfloat16),
                    preferred_element_type=jnp.float32) + head_params["b2"])


if __name__ == "__main__":
    key = jax.random.PRNGKey(0)
    in_channels, hidden, out_channels = 8, 32, 2
    num_nodes, num_edges, num_graphs = 16, 40, 2

    k_x, k_e, k_p = jax.random.split(key, 3)
    x = jax.random.normal(k_x, (num_nodes, in_channels), jnp.float32)
    edge_index = jax.random.randint(k_e, (2, num_edges), 0, num_nodes, jnp.int32)
    # first half of nodes -> graph 0, second half -> graph 1
    batch = jnp.concatenate([jnp.zeros(num_nodes // 2, jnp.int32),
                             jnp.ones(num_nodes - num_nodes // 2, jnp.int32)])

    conv_params, head_params = make_gin_params(k_p, in_channels, hidden, out_channels)

    fwd = jax.jit(functools.partial(gin_forward, num_graphs=num_graphs))
    out = fwd(x, edge_index, batch, conv_params, head_params)
    out = jax.block_until_ready(out)

    ref = gin_forward_ref(x, edge_index, batch, conv_params, head_params, num_graphs)
    assert out.shape == (num_graphs, out_channels)
    assert jnp.allclose(out, ref, atol=2e-3, rtol=2e-3), "mismatch vs reference"

    print("KERNEL_OK")
</pallas_src>

<mosaic_0001>
module attributes {stable_mosaic.version = 11 : i64} {
  func.func @_gin_fused_kernel(%arg0: memref<128x128xbf16, #tpu.memory_space<vmem>>, %arg1: memref<8x128xbf16, #tpu.memory_space<vmem>>, %arg2: memref<128x128xbf16, #tpu.memory_space<vmem>>, %arg3: memref<5x128x128xbf16, #tpu.memory_space<vmem>>, %arg4: memref<5x1x128xf32, #tpu.memory_space<vmem>>, %arg5: memref<5x128x128xbf16, #tpu.memory_space<vmem>>, %arg6: memref<5x1x128xf32, #tpu.memory_space<vmem>>, %arg7: memref<128x128xbf16, #tpu.memory_space<vmem>>, %arg8: memref<1x128xf32, #tpu.memory_space<vmem>>, %arg9: memref<128x128xbf16, #tpu.memory_space<vmem>>, %arg10: memref<1x128xf32, #tpu.memory_space<vmem>>, %arg11: memref<8x128xf32, #tpu.memory_space<vmem>>) attributes {dimension_semantics = [], scalar_prefetch = 0 : i64, scratch_operands = 0 : i64, tpu.core_type = #tpu.core_type<tc>} {
    %c0 = arith.constant 0 : index
    %c0_0 = arith.constant 0 : index
    %0 = vector.load %arg0[%c0, %c0_0] : memref<128x128xbf16, #tpu.memory_space<vmem>>, vector<128x128xbf16>
    %c0_1 = arith.constant 0 : index
    %c0_2 = arith.constant 0 : index
    %1 = vector.load %arg2[%c0_1, %c0_2] : memref<128x128xbf16, #tpu.memory_space<vmem>>, vector<128x128xbf16>
    %c0_i32 = arith.constant 0 : i32
    %c5_i32 = arith.constant 5 : i32
    %2 = arith.addi %c0_i32, %c5_i32 : i32
    %c1_i32 = arith.constant 1 : i32
    %3 = scf.for %arg12 = %c0_i32 to %2 step %c1_i32 iter_args(%arg13 = %1) -> (vector<128x128xbf16>)  : i32 {
      %cst_19 = arith.constant dense<0.000000e+00> : vector<128x128xf32>
      %21 = tpu.matmul %0, %arg13, %cst_19 {dimension_numbers = #tpu.dot_dimension_numbers<[1], [0], [0], [1], [0, 0, 1, 1], [], []>} : vector<128x128xbf16>, vector<128x128xbf16>, vector<128x128xf32> -> vector<128x128xf32>
      %22 = arith.truncf %21 : vector<128x128xf32> to vector<128x128xbf16>
      %23 = arith.index_cast %arg12 : i32 to index
      %c0_20 = arith.constant 0 : index
      %c0_21 = arith.constant 0 : index
      %24 = vector.load %arg3[%23, %c0_20, %c0_21] : memref<5x128x128xbf16, #tpu.memory_space<vmem>>, vector<1x128x128xbf16>
      %25 = vector.shape_cast %24 : vector<1x128x128xbf16> to vector<128x128xbf16>
      %cst_22 = arith.constant dense<0.000000e+00> : vector<128x128xf32>
      %26 = tpu.matmul %22, %25, %cst_22 {dimension_numbers = #tpu.dot_dimension_numbers<[1], [0], [0], [1], [0, 0, 1, 1], [], []>} : vector<128x128xbf16>, vector<128x128xbf16>, vector<128x128xf32> -> vector<128x128xf32>
      %27 = arith.index_cast %arg12 : i32 to index
      %c0_23 = arith.constant 0 : index
      %c0_24 = arith.constant 0 : index
      %28 = vector.load %arg4[%27, %c0_23, %c0_24] : memref<5x1x128xf32, #tpu.memory_space<vmem>>, vector<1x1x128xf32>
      %29 = vector.shape_cast %28 : vector<1x1x128xf32> to vector<1x128xf32>
      %30 = vector.broadcast %29 : vector<1x128xf32> to vector<128x128xf32>
      %31 = arith.addf %26, %30 : vector<128x128xf32>
      %cst_25 = arith.constant 0.000000e+00 : f32
      %32 = vector.broadcast %cst_25 : f32 to vector<128x128xf32>
      %33 = arith.maximumf %31, %32 : vector<128x128xf32>
      %34 = arith.truncf %33 : vector<128x128xf32> to vector<128x128xbf16>
      %35 = arith.index_cast %arg12 : i32 to index
      %c0_26 = arith.constant 0 : index
      %c0_27 = arith.constant 0 : index
      %36 = vector.load %arg5[%35, %c0_26, %c0_27] : memref<5x128x128xbf16, #tpu.memory_space<vmem>>, vector<1x128x128xbf16>
      %37 = vector.shape_cast %36 : vector<1x128x128xbf16> to vector<128x128xbf16>
      %cst_28 = arith.constant dense<0.000000e+00> : vector<128x128xf32>
      %38 = tpu.matmul %34, %37, %cst_28 {dimension_numbers = #tpu.dot_dimension_numbers<[1], [0], [0], [1], [0, 0, 1, 1], [], []>} : vector<128x128xbf16>, vector<128x128xbf16>, vector<128x128xf32> -> vector<128x128xf32>
      %39 = arith.index_cast %arg12 : i32 to index
      %c0_29 = arith.constant 0 : index
      %c0_30 = arith.constant 0 : index
      %40 = vector.load %arg6[%39, %c0_29, %c0_30] : memref<5x1x128xf32, #tpu.memory_space<vmem>>, vector<1x1x128xf32>
      %41 = vector.shape_cast %40 : vector<1x1x128xf32> to vector<1x128xf32>
      %42 = vector.broadcast %41 : vector<1x128xf32> to vector<128x128xf32>
      %43 = arith.addf %38, %42 : vector<128x128xf32>
      %cst_31 = arith.constant 0.000000e+00 : f32
      %44 = vector.broadcast %cst_31 : f32 to vector<128x128xf32>
      %45 = arith.maximumf %43, %44 : vector<128x128xf32>
      %46 = arith.truncf %45 : vector<128x128xf32> to vector<128x128xbf16>
      scf.yield %46 : vector<128x128xbf16>
    }
    %c5_i32_3 = arith.constant 5 : i32
    %c0_4 = arith.constant 0 : index
    %c0_5 = arith.constant 0 : index
    %4 = vector.load %arg1[%c0_4, %c0_5] : memref<8x128xbf16, #tpu.memory_space<vmem>>, vector<8x128xbf16>
    %cst = arith.constant dense<0.000000e+00> : vector<8x128xf32>
    %5 = tpu.matmul %4, %3, %cst {dimension_numbers = #tpu.dot_dimension_numbers<[1], [0], [0], [1], [0, 0, 1, 1], [], []>} : vector<8x128xbf16>, vector<128x128xbf16>, vector<8x128xf32> -> vector<8x128xf32>
    %6 = arith.truncf %5 : vector<8x128xf32> to vector<8x128xbf16>
    %c0_6 = arith.constant 0 : index
    %c0_7 = arith.constant 0 : index
    %7 = vector.load %arg7[%c0_6, %c0_7] : memref<128x128xbf16, #tpu.memory_space<vmem>>, vector<128x128xbf16>
    %cst_8 = arith.constant dense<0.000000e+00> : vector<8x128xf32>
    %8 = tpu.matmul %6, %7, %cst_8 {dimension_numbers = #tpu.dot_dimension_numbers<[1], [0], [0], [1], [0, 0, 1, 1], [], []>} : vector<8x128xbf16>, vector<128x128xbf16>, vector<8x128xf32> -> vector<8x128xf32>
    %c0_9 = arith.constant 0 : index
    %c0_10 = arith.constant 0 : index
    %9 = vector.load %arg8[%c0_9, %c0_10] : memref<1x128xf32, #tpu.memory_space<vmem>>, vector<1x128xf32>
    %10 = vector.broadcast %9 : vector<1x128xf32> to vector<8x128xf32>
    %11 = arith.addf %8, %10 : vector<8x128xf32>
    %cst_11 = arith.constant 0.000000e+00 : f32
    %12 = vector.broadcast %cst_11 : f32 to vector<8x128xf32>
    %13 = arith.maximumf %11, %12 : vector<8x128xf32>
    %14 = arith.truncf %13 : vector<8x128xf32> to vector<8x128xbf16>
    %c0_12 = arith.constant 0 : index
    %c0_13 = arith.constant 0 : index
    %15 = vector.load %arg9[%c0_12, %c0_13] : memref<128x128xbf16, #tpu.memory_space<vmem>>, vector<128x128xbf16>
    %cst_14 = arith.constant dense<0.000000e+00> : vector<8x128xf32>
    %16 = tpu.matmul %14, %15, %cst_14 {dimension_numbers = #tpu.dot_dimension_numbers<[1], [0], [0], [1], [0, 0, 1, 1], [], []>} : vector<8x128xbf16>, vector<128x128xbf16>, vector<8x128xf32> -> vector<8x128xf32>
    %c0_15 = arith.constant 0 : index
    %c0_16 = arith.constant 0 : index
    %17 = vector.load %arg10[%c0_15, %c0_16] : memref<1x128xf32, #tpu.memory_space<vmem>>, vector<1x128xf32>
    %18 = vector.broadcast %17 : vector<1x128xf32> to vector<8x128xf32>
    %19 = arith.addf %16, %18 : vector<8x128xf32>
    %c0_17 = arith.constant 0 : index
    %c0_18 = arith.constant 0 : index
    %20 = vector.load %arg11[%c0_17, %c0_18] : memref<8x128xf32, #tpu.memory_space<vmem>>, vector<8x128xf32>
    tpu.vector_store %arg11[%c0_17, %c0_18], %19 {strides = array<i32>} : memref<8x128xf32, #tpu.memory_space<vmem>>, vector<8x128xf32>,
    return
  }
}

</mosaic_0001>

<llo_original>
// kernel: gin_forward.1
$region0: #{gin_forward.1}
  #allocation0 [shape = 'u32[]', space=smem, size = 0x4, offset = 0x4, fixed_abs, tag = 'smem constant byte address 0x4 - core index']
  #allocation1 [shape = 'u32[144,128]{1,0:T(1,128)}', space=vmem, size = 0x12000, scoped, tag = 'internal scratch']
  %s0 = inlined_call_operand.vmem [shape: bf16[128,128], index: 0, kind: input, shape index: {}]
  %s1 = inlined_call_operand.vmem [shape: bf16[8,128], index: 1, kind: input, shape index: {}]
  %s2 = inlined_call_operand.vmem [shape: bf16[128,128], index: 2, kind: input, shape index: {}]
  %s3 = inlined_call_operand.vmem [shape: bf16[5,128,128], index: 3, kind: input, shape index: {}]
  %s4 = inlined_call_operand.vmem [shape: f32[5,1,128], index: 4, kind: input, shape index: {}]
  %s5 = inlined_call_operand.vmem [shape: bf16[5,128,128], index: 5, kind: input, shape index: {}]
  %s6 = inlined_call_operand.vmem [shape: f32[5,1,128], index: 6, kind: input, shape index: {}]
  %s7 = inlined_call_operand.vmem [shape: bf16[128,128], index: 7, kind: input, shape index: {}]
  %s8 = inlined_call_operand.vmem [shape: f32[1,128], index: 8, kind: input, shape index: {}]
  %s9 = inlined_call_operand.vmem [shape: bf16[128,128], index: 9, kind: input, shape index: {}]
  %s10 = inlined_call_operand.vmem [shape: f32[1,128], index: 10, kind: input, shape index: {}]
  %s11 = inlined_call_operand.vmem [shape: f32[8,128], index: 11, kind: output, shape index: {}]
  %s12 = sld [smem:[#allocation0]]
  $region61: #{gin_forward.1} parent=0
    _
  %s14 = ssub.s32 1, %s12
  %s15 = scalar_select 0, %s14, %s12
  // Predicated region
  $region2: #{gin_forward.1} parent=0 // pred_check
    _
  $region3: #{gin_forward.1} parent=0 // pred_check_branch
    %17 = sbr.rel (0) target = $region5
  $region4: #{gin_forward.1} parent=0 // pred_region
    _
  $region5: #{gin_forward.1} parent=0 // pred_fallthru
    _
  // Predicated region
  $region6: #{gin_forward.1} parent=0 // pred_check
    _
  $region7: #{gin_forward.1} parent=0 // pred_check_branch
    %19 = sbr.rel (0) target = $region9
  $region8: #{gin_forward.1} parent=0 // pred_region
    _
  $region9: #{gin_forward.1} parent=0 // pred_fallthru
    _
  // Predicated region
  $region10: #{gin_forward.1} parent=0 // pred_check
    _
  $region11: #{gin_forward.1} parent=0 // pred_check_branch
    %21 = sbr.rel (0) target = $region13
  $region12: #{gin_forward.1} parent=0 // pred_region
    _
  $region13: #{gin_forward.1} parent=0 // pred_fallthru
    _
  // Predicated region
  $region14: #{gin_forward.1} parent=0 // pred_check
    _
  $region15: #{gin_forward.1} parent=0 // pred_check_branch
    %23 = sbr.rel (0) target = $region17
  $region16: #{gin_forward.1} parent=0 // pred_region
    _
  $region17: #{gin_forward.1} parent=0 // pred_fallthru
    _
  // Predicated region
  $region18: #{gin_forward.1} parent=0 // pred_check
    _
  $region19: #{gin_forward.1} parent=0 // pred_check_branch
    %25 = sbr.rel (0) target = $region21
  $region20: #{gin_forward.1} parent=0 // pred_region
    _
  $region21: #{gin_forward.1} parent=0 // pred_fallthru
    _
  // Predicated region
  $region22: #{gin_forward.1} parent=0 // pred_check
    _
  $region23: #{gin_forward.1} parent=0 // pred_check_branch
    %27 = sbr.rel (0) target = $region25
  $region24: #{gin_forward.1} parent=0 // pred_region
    _
  $region25: #{gin_forward.1} parent=0 // pred_fallthru
    _
  // Predicated region
  $region26: #{gin_forward.1} parent=0 // pred_check
    _
  $region27: #{gin_forward.1} parent=0 // pred_check_branch
    %29 = sbr.rel (0) target = $region29
  $region28: #{gin_forward.1} parent=0 // pred_region
    _
  $region29: #{gin_forward.1} parent=0 // pred_fallthru
    _
  // Predicated region
  $region30: #{gin_forward.1} parent=0 // pred_check
    _
  $region31: #{gin_forward.1} parent=0 // pred_check_branch
    %31 = sbr.rel (0) target = $region33
  $region32: #{gin_forward.1} parent=0 // pred_region
    _
  $region33: #{gin_forward.1} parent=0 // pred_fallthru
    _
  // Predicated region
  $region34: #{gin_forward.1} parent=0 // pred_check
    _
  $region35: #{gin_forward.1} parent=0 // pred_check_branch
    %33 = sbr.rel (0) target = $region37
  $region36: #{gin_forward.1} parent=0 // pred_region
    _
  $region37: #{gin_forward.1} parent=0 // pred_fallthru
    _
  // Predicated region
  $region38: #{gin_forward.1} parent=0 // pred_check
    _
  $region39: #{gin_forward.1} parent=0 // pred_check_branch
    %35 = sbr.rel (0) target = $region41
  $region40: #{gin_forward.1} parent=0 // pred_region
    _
  $region41: #{gin_forward.1} parent=0 // pred_fallthru
    _
  // Predicated region
  $region42: #{gin_forward.1} parent=0 // pred_check
    _
  $region43: #{gin_forward.1} parent=0 // pred_check_branch
    %37 = sbr.rel (0) target = $region45
  $region44: #{gin_forward.1} parent=0 // pred_region
    _
  $region45: #{gin_forward.1} parent=0 // pred_fallthru
    _
  %v39 = vld [vmem:[%s0] sm:$0xf]
  %v40 = vld [vmem:[%s0 + $0x4] sm:$0xf]
  %v41 = vld [vmem:[%s0 + $0x8] sm:$0xf]
  %v42 = vld [vmem:[%s0 + $0xc] sm:$0xf]
  %v43 = vld [vmem:[%s0 + $0x10] sm:$0xf]
  %v44 = vld [vmem:[%s0 + $0x14] sm:$0xf]
  %v45 = vld [vmem:[%s0 + $0x18] sm:$0xf]
  %v46 = vld [vmem:[%s0 + $0x1c] sm:$0xf]
  %v47 = vld [vmem:[%s0 + $0x20] sm:$0xf]
  %v48 = vld [vmem:[%s0 + $0x24] sm:$0xf]
  %v49 = vld [vmem:[%s0 + $0x28] sm:$0xf]
  %v50 = vld [vmem:[%s0 + $0x2c] sm:$0xf]
  %v51 = vld [vmem:[%s0 + $0x30] sm:$0xf]
  %v52 = vld [vmem:[%s0 + $0x34] sm:$0xf]
  %v53 = vld [vmem:[%s0 + $0x38] sm:$0xf]
  %v54 = vld [vmem:[%s0 + $0x3c] sm:$0xf]
  %v55 = vld [vmem:[%s2] sm:$0xf]
  %v56 = vld [vmem:[%s2 + $0x4] sm:$0xf]
  %v57 = vld [vmem:[%s2 + $0x8] sm:$0xf]
  %v58 = vld [vmem:[%s2 + $0xc] sm:$0xf]
  %v59 = vld [vmem:[%s2 + $0x10] sm:$0xf]
  %v60 = vld [vmem:[%s2 + $0x14] sm:$0xf]
  %v61 = vld [vmem:[%s2 + $0x18] sm:$0xf]
  %v62 = vld [vmem:[%s2 + $0x1c] sm:$0xf]
  %v63 = vld [vmem:[%s2 + $0x20] sm:$0xf]
  %v64 = vld [vmem:[%s2 + $0x24] sm:$0xf]
  %v65 = vld [vmem:[%s2 + $0x28] sm:$0xf]
  %v66 = vld [vmem:[%s2 + $0x2c] sm:$0xf]
  %v67 = vld [vmem:[%s2 + $0x30] sm:$0xf]
  %v68 = vld [vmem:[%s2 + $0x34] sm:$0xf]
  %v69 = vld [vmem:[%s2 + $0x38] sm:$0xf]
  %v70 = vld [vmem:[%s2 + $0x3c] sm:$0xf]
  %v87 = vunpack.c.l.b16 %v55
  %v88 = vunpack.c.l.b16 %v56
  %v89 = vunpack.c.l.b16 %v57
  %v90 = vunpack.c.l.b16 %v58
  %v91 = vunpack.c.l.b16 %v59
  %v92 = vunpack.c.l.b16 %v60
  %v93 = vunpack.c.l.b16 %v61
  %v94 = vunpack.c.l.b16 %v62
  %v95 = vunpack.c.l.b16 %v63
  %v96 = vunpack.c.l.b16 %v64
  %v97 = vunpack.c.l.b16 %v65
  %v98 = vunpack.c.l.b16 %v66
  %v99 = vunpack.c.l.b16 %v67
  %v100 = vunpack.c.l.b16 %v68
  %v101 = vunpack.c.l.b16 %v69
  %v102 = vunpack.c.l.b16 %v70
  %v103 = vpack.c.b16 %v88, %v87
  %v104 = vpack.c.b16 %v90, %v89
  %v105 = vpack.c.b16 %v92, %v91
  %v106 = vpack.c.b16 %v94, %v93
  %v107 = vpack.c.b16 %v96, %v95
  %v108 = vpack.c.b16 %v98, %v97
  %v109 = vpack.c.b16 %v100, %v99
  %v110 = vpack.c.b16 %v102, %v101
  loop: start=0, step=1, limit=5
  $region46: #{gin_forward.1} parent=0 // loop_pre_header
    _
  $region47: #{gin_forward.1} parent=0 // loop_header
    %s120 = sphi 0, %s124
    %p121 = scmp.ge.s32.totalorder %s120, 5
    %v125 = vphi %v103, %v669
    %v126 = vphi %v104, %v670
    %v127 = vphi %v105, %v671
    %v128 = vphi %v106, %v672
    %v129 = vphi %v107, %v673
    %v130 = vphi %v108, %v674
    %v131 = vphi %v109, %v675
    %v132 = vphi %v110, %v676
  $region48: #{gin_forward.1} parent=0 // loop_header_branch
    %123 = sbr.rel (%p121) target = $region52
  $region49: #{gin_forward.1} parent=0 // loop_body
    %v149 = vunpack.c.l.b16 %v39
    %v150 = vunpack.c.l.b16 %v40
    %v151 = vunpack.c.l.b16 %v41
    %v152 = vunpack.c.l.b16 %v42
    %v153 = vunpack.c.l.b16 %v43
    %v154 = vunpack.c.l.b16 %v44
    %v155 = vunpack.c.l.b16 %v45
    %v156 = vunpack.c.l.b16 %v46
    %v157 = vunpack.c.l.b16 %v47
    %v158 = vunpack.c.l.b16 %v48
    %v159 = vunpack.c.l.b16 %v49
    %v160 = vunpack.c.l.b16 %v50
    %v161 = vunpack.c.l.b16 %v51
    %v162 = vunpack.c.l.b16 %v52
    %v163 = vunpack.c.l.b16 %v53
    %v164 = vunpack.c.l.b16 %v54
    %v165 = vpack.c.b16 %v150, %v149
    %v166 = vpack.c.b16 %v152, %v151
    %v167 = vpack.c.b16 %v154, %v153
    %v168 = vpack.c.b16 %v156, %v155
    %v169 = vpack.c.b16 %v158, %v157
    %v170 = vpack.c.b16 %v160, %v159
    %v171 = vpack.c.b16 %v162, %v161
    %v172 = vpack.c.b16 %v164, %v163
    %181 = vmatprep.subr.bf16.mxu0 0
    %182 = vmatpush1.bf16.msra.mxu0 %v132
    %183 = vmatprep.subr.bf16.mxu0 0
    %184 = vmatpush1.bf16.msra.mxu0 %v131
    %185 = vmatprep.subr.bf16.mxu0 0
    %186 = vmatpush1.bf16.msra.mxu0 %v130
    %187 = vmatprep.subr.bf16.mxu0 0
    %188 = vmatpush1.bf16.msra.mxu0 %v129
    %189 = vmatprep.subr.bf16.mxu0 0
    %190 = vmatpush1.bf16.msra.mxu0 %v128
    %191 = vmatprep.subr.bf16.mxu0 0
    %192 = vmatpush1.bf16.msra.mxu0 %v127
    %193 = vmatprep.subr.bf16.mxu0 0
    %194 = vmatpush1.bf16.msra.mxu0 %v126
    %195 = vmatprep.subr.bf16.mxu0 0
    %196 = vmatpush1.bf16.msra.mxu0 %v125
    %197 = vmatprep.subr.bf16.mxu0 0
    %198 = vmatpush2.bf16.msra.mxu0 0
    %199 = vmatprep.subr.bf16.mxu0 0
    %200 = vmatpush2.bf16.msra.mxu0 0
    %201 = vmatprep.subr.bf16.mxu0 0
    %202 = vmatpush2.bf16.msra.mxu0 0
    %203 = vmatprep.subr.bf16.mxu0 0
    %204 = vmatpush2.bf16.msra.mxu0 0
    %205 = vmatprep.subr.bf16.mxu0 0
    %206 = vmatpush2.bf16.msra.mxu0 0
    %207 = vmatprep.subr.bf16.mxu0 0
    %208 = vmatpush2.bf16.msra.mxu0 0
    %209 = vmatprep.subr.bf16.mxu0 0
    %210 = vmatpush2.bf16.msra.mxu0 0
    %211 = vmatprep.subr.bf16.mxu0 0
    %212 = vmatpush2.bf16.msra.mxu0 0
    %213 = vmatprep.mubr.bf16.mxu0 0
    %214 = vmatmul.mubr.bf16.gmra.mxu0 %v165
    %v215 = vpop.f32.mrf.mxu0
    %v216 = vadd.f32 0.0, %v215
    %v217 = vpop.f32.mrf.mxu0
    %v218 = vpop.f32.mrf.mxu0
    %v219 = vadd.f32 0.0, %v218
    %v220 = vpop.f32.mrf.mxu0
    %221 = vmatprep.mubr.bf16.mxu0 0
    %222 = vmatmul.mubr.bf16.gmra.mxu0 %v166
    %v223 = vpop.f32.mrf.mxu0
    %v224 = vadd.f32 0.0, %v223
    %v225 = vpop.f32.mrf.mxu0
    %v226 = vpop.f32.mrf.mxu0
    %v227 = vadd.f32 0.0, %v226
    %v228 = vpop.f32.mrf.mxu0
    %229 = vmatprep.mubr.bf16.mxu0 0
    %230 = vmatmul.mubr.bf16.gmra.mxu0 %v167
    %v231 = vpop.f32.mrf.mxu0
    %v232 = vadd.f32 0.0, %v231
    %v233 = vpop.f32.mrf.mxu0
    %v234 = vpop.f32.mrf.mxu0
    %v235 = vadd.f32 0.0, %v234
    %v236 = vpop.f32.mrf.mxu0
    %237 = vmatprep.mubr.bf16.mxu0 0
    %238 = vmatmul.mubr.bf16.gmra.mxu0 %v168
    %v239 = vpop.f32.mrf.mxu0
    %v240 = vadd.f32 0.0, %v239
    %v241 = vpop.f32.mrf.mxu0
    %v242 = vpop.f32.mrf.mxu0
    %v243 = vadd.f32 0.0, %v242
    %v244 = vpop.f32.mrf.mxu0
    %245 = vmatprep.mubr.bf16.mxu0 0
    %246 = vmatmul.mubr.bf16.gmra.mxu0 %v169
    %v247 = vpop.f32.mrf.mxu0
    %v248 = vadd.f32 0.0, %v247
    %v249 = vpop.f32.mrf.mxu0
    %v250 = vpop.f32.mrf.mxu0
    %v251 = vadd.f32 0.0, %v250
    %v252 = vpop.f32.mrf.mxu0
    %253 = vmatprep.mubr.bf16.mxu0 0
    %254 = vmatmul.mubr.bf16.gmra.mxu0 %v170
    %v255 = vpop.f32.mrf.mxu0
    %v256 = vadd.f32 0.0, %v255
    %v257 = vpop.f32.mrf.mxu0
    %v258 = vpop.f32.mrf.mxu0
    %v259 = vadd.f32 0.0, %v258
    %v260 = vpop.f32.mrf.mxu0
    %261 = vmatprep.mubr.bf16.mxu0 0
    %262 = vmatmul.mubr.bf16.gmra.mxu0 %v171
    %v263 = vpop.f32.mrf.mxu0
    %v264 = vadd.f32 0.0, %v263
    %v265 = vpop.f32.mrf.mxu0
    %v266 = vpop.f32.mrf.mxu0
    %v267 = vadd.f32 0.0, %v266
    %v268 = vpop.f32.mrf.mxu0
    %269 = vmatprep.mubr.bf16.mxu0 0
    %270 = vmatmul.mubr.bf16.gmra.mxu0 %v172
    %v271 = vpop.f32.mrf.mxu0
    %v272 = vadd.f32 0.0, %v271
    %v273 = vpop.f32.mrf.mxu0
    %v274 = vpop.f32.mrf.mxu0
    %v275 = vadd.f32 0.0, %v274
    %v276 = vpop.f32.mrf.mxu0
    %277 = vdwg.mxu0
    %v278 = vpack.c.bf16 %v219, %v216
    %v279 = vpack.c.bf16 %v227, %v224
    %v280 = vpack.c.bf16 %v235, %v232
    %v281 = vpack.c.bf16 %v243, %v240
    %v282 = vpack.c.bf16 %v251, %v248
    %v283 = vpack.c.bf16 %v259, %v256
    %v284 = vpack.c.bf16 %v267, %v264
    %v285 = vpack.c.bf16 %v275, %v272
    %s286 = smul.u32 %s120, 16
    %s287 = smul.addr %s286, 4
    %s288 = scalar_lea.vmem %s3, %s287
    %v289 = vld [vmem:[%s288] sm:$0xf]
    %v290 = vld [vmem:[%s288 + $0x4] sm:$0xf]
    %v291 = vld [vmem:[%s288 + $0x8] sm:$0xf]
    %v292 = vld [vmem:[%s288 + $0xc] sm:$0xf]
    %v293 = vld [vmem:[%s288 + $0x10] sm:$0xf]
    %v294 = vld [vmem:[%s288 + $0x14] sm:$0xf]
    %v295 = vld [vmem:[%s288 + $0x18] sm:$0xf]
    %v296 = vld [vmem:[%s288 + $0x1c] sm:$0xf]
    %v297 = vld [vmem:[%s288 + $0x20] sm:$0xf]
    %v298 = vld [vmem:[%s288 + $0x24] sm:$0xf]
    %v299 = vld [vmem:[%s288 + $0x28] sm:$0xf]
    %v300 = vld [vmem:[%s288 + $0x2c] sm:$0xf]
    %v301 = vld [vmem:[%s288 + $0x30] sm:$0xf]
    %v302 = vld [vmem:[%s288 + $0x34] sm:$0xf]
    %v303 = vld [vmem:[%s288 + $0x38] sm:$0xf]
    %v304 = vld [vmem:[%s288 + $0x3c] sm:$0xf]
    %s305 = scalar_lea.vmem %s4, %s120
    %v306 = vld [vmem:[%s305] sm:$0x1]
    %v308 = vlaneseq
    %v309 = vshrl.u32 %v308, 7
    %v310 = vsub.s32 0, %v309
    %v311 = vrot.slane %v306, %v310
    %v329 = vunpack.c.l.b16 %v289
    %v330 = vunpack.c.l.b16 %v290
    %v331 = vunpack.c.l.b16 %v291
    %v332 = vunpack.c.l.b16 %v292
    %v333 = vunpack.c.l.b16 %v293
    %v334 = vunpack.c.l.b16 %v294
    %v335 = vunpack.c.l.b16 %v295
    %v336 = vunpack.c.l.b16 %v296
    %v337 = vunpack.c.l.b16 %v297
    %v338 = vunpack.c.l.b16 %v298
    %v339 = vunpack.c.l.b16 %v299
    %v340 = vunpack.c.l.b16 %v300
    %v341 = vunpack.c.l.b16 %v301
    %v342 = vunpack.c.l.b16 %v302
    %v343 = vunpack.c.l.b16 %v303
    %v344 = vunpack.c.l.b16 %v304
    %v345 = vpack.c.b16 %v330, %v329
    %v346 = vpack.c.b16 %v332, %v331
    %v347 = vpack.c.b16 %v334, %v333
    %v348 = vpack.c.b16 %v336, %v335
    %v349 = vpack.c.b16 %v338, %v337
    %v350 = vpack.c.b16 %v340, %v339
    %v351 = vpack.c.b16 %v342, %v341
    %v352 = vpack.c.b16 %v344, %v343
    %361 = vmatprep.subr.bf16.mxu0 0
    %362 = vmatpush1.bf16.msra.mxu0 %v352
    %363 = vmatprep.subr.bf16.mxu0 0
    %364 = vmatpush1.bf16.msra.mxu0 %v351
    %365 = vmatprep.subr.bf16.mxu0 0
    %366 = vmatpush1.bf16.msra.mxu0 %v350
    %367 = vmatprep.subr.bf16.mxu0 0
    %368 = vmatpush1.bf16.msra.mxu0 %v349
    %369 = vmatprep.subr.bf16.mxu0 0
    %370 = vmatpush1.bf16.msra.mxu0 %v348
    %371 = vmatprep.subr.bf16.mxu0 0
    %372 = vmatpush1.bf16.msra.mxu0 %v347
    %373 = vmatprep.subr.bf16.mxu0 0
    %374 = vmatpush1.bf16.msra.mxu0 %v346
    %375 = vmatprep.subr.bf16.mxu0 0
    %376 = vmatpush1.bf16.msra.mxu0 %v345
    %377 = vmatprep.subr.bf16.mxu0 0
    %378 = vmatpush2.bf16.msra.mxu0 0
    %379 = vmatprep.subr.bf16.mxu0 0
    %380 = vmatpush2.bf16.msra.mxu0 0
    %381 = vmatprep.subr.bf16.mxu0 0
    %382 = vmatpush2.bf16.msra.mxu0 0
    %383 = vmatprep.subr.bf16.mxu0 0
    %384 = vmatpush2.bf16.msra.mxu0 0
    %385 = vmatprep.subr.bf16.mxu0 0
    %386 = vmatpush2.bf16.msra.mxu0 0
    %387 = vmatprep.subr.bf16.mxu0 0
    %388 = vmatpush2.bf16.msra.mxu0 0
    %389 = vmatprep.subr.bf16.mxu0 0
    %390 = vmatpush2.bf16.msra.mxu0 0
    %391 = vmatprep.subr.bf16.mxu0 0
    %392 = vmatpush2.bf16.msra.mxu0 0
    %393 = vmatprep.mubr.bf16.mxu0 0
    %394 = vmatmul.mubr.bf16.gmra.mxu0 %v278
    %v395 = vpop.f32.mrf.mxu0
    %v396 = vadd.f32 %v311, %v395
    %v397 = vpop.f32.mrf.mxu0
    %v398 = vpop.f32.mrf.mxu0
    %v399 = vadd.f32 %v311, %v398
    %v400 = vpop.f32.mrf.mxu0
    %401 = vmatprep.mubr.bf16.mxu0 0
    %402 = vmatmul.mubr.bf16.gmra.mxu0 %v279
    %v403 = vpop.f32.mrf.mxu0
    %v404 = vadd.f32 %v311, %v403
    %v405 = vpop.f32.mrf.mxu0
    %v406 = vpop.f32.mrf.mxu0
    %v407 = vadd.f32 %v311, %v406
    %v408 = vpop.f32.mrf.mxu0
    %409 = vmatprep.mubr.bf16.mxu0 0
    %410 = vmatmul.mubr.bf16.gmra.mxu0 %v280
    %v411 = vpop.f32.mrf.mxu0
    %v412 = vadd.f32 %v311, %v411
    %v413 = vpop.f32.mrf.mxu0
    %v414 = vpop.f32.mrf.mxu0
    %v415 = vadd.f32 %v311, %v414
    %v416 = vpop.f32.mrf.mxu0
    %417 = vmatprep.mubr.bf16.mxu0 0
    %418 = vmatmul.mubr.bf16.gmra.mxu0 %v281
    %v419 = vpop.f32.mrf.mxu0
    %v420 = vadd.f32 %v311, %v419
    %v421 = vpop.f32.mrf.mxu0
    %v422 = vpop.f32.mrf.mxu0
    %v423 = vadd.f32 %v311, %v422
    %v424 = vpop.f32.mrf.mxu0
    %425 = vmatprep.mubr.bf16.mxu0 0
    %426 = vmatmul.mubr.bf16.gmra.mxu0 %v282
    %v427 = vpop.f32.mrf.mxu0
    %v428 = vadd.f32 %v311, %v427
    %v429 = vpop.f32.mrf.mxu0
    %v430 = vpop.f32.mrf.mxu0
    %v431 = vadd.f32 %v311, %v430
    %v432 = vpop.f32.mrf.mxu0
    %433 = vmatprep.mubr.bf16.mxu0 0
    %434 = vmatmul.mubr.bf16.gmra.mxu0 %v283
    %v435 = vpop.f32.mrf.mxu0
    %v436 = vadd.f32 %v311, %v435
    %v437 = vpop.f32.mrf.mxu0
    %v438 = vpop.f32.mrf.mxu0
    %v439 = vadd.f32 %v311, %v438
    %v440 = vpop.f32.mrf.mxu0
    %441 = vmatprep.mubr.bf16.mxu0 0
    %442 = vmatmul.mubr.bf16.gmra.mxu0 %v284
    %v443 = vpop.f32.mrf.mxu0
    %v444 = vadd.f32 %v311, %v443
    %v445 = vpop.f32.mrf.mxu0
    %v446 = vpop.f32.mrf.mxu0
    %v447 = vadd.f32 %v311, %v446
    %v448 = vpop.f32.mrf.mxu0
    %449 = vmatprep.mubr.bf16.mxu0 0
    %450 = vmatmul.mubr.bf16.gmra.mxu0 %v285
    %v451 = vpop.f32.mrf.mxu0
    %v452 = vadd.f32 %v311, %v451
    %v453 = vpop.f32.mrf.mxu0
    %v454 = vpop.f32.mrf.mxu0
    %v455 = vadd.f32 %v311, %v454
    %v456 = vpop.f32.mrf.mxu0
    %457 = vdwg.mxu0
    %v458 = vmax.f32 %v396, 0.0
    %v459 = vmax.f32 %v399, 0.0
    %v460 = vmax.f32 %v404, 0.0
    %v461 = vmax.f32 %v407, 0.0
    %v462 = vmax.f32 %v412, 0.0
    %v463 = vmax.f32 %v415, 0.0
    %v464 = vmax.f32 %v420, 0.0
    %v465 = vmax.f32 %v423, 0.0
    %v466 = vmax.f32 %v428, 0.0
    %v467 = vmax.f32 %v431, 0.0
    %v468 = vmax.f32 %v436, 0.0
    %v469 = vmax.f32 %v439, 0.0
    %v470 = vmax.f32 %v444, 0.0
    %v471 = vmax.f32 %v447, 0.0
    %v472 = vmax.f32 %v452, 0.0
    %v473 = vmax.f32 %v455, 0.0
    %v474 = vpack.c.bf16 %v459, %v458
    %v475 = vpack.c.bf16 %v461, %v460
    %v476 = vpack.c.bf16 %v463, %v462
    %v477 = vpack.c.bf16 %v465, %v464
    %v478 = vpack.c.bf16 %v467, %v466
    %v479 = vpack.c.bf16 %v469, %v468
    %v480 = vpack.c.bf16 %v471, %v470
    %v481 = vpack.c.bf16 %v473, %v472
    %s482 = smul.addr %s286, 4
    %s483 = scalar_lea.vmem %s5, %s482
    %v484 = vld [vmem:[%s483] sm:$0xf]
    %v485 = vld [vmem:[%s483 + $0x4] sm:$0xf]
    %v486 = vld [vmem:[%s483 + $0x8] sm:$0xf]
    %v487 = vld [vmem:[%s483 + $0xc] sm:$0xf]
    %v488 = vld [vmem:[%s483 + $0x10] sm:$0xf]
    %v489 = vld [vmem:[%s483 + $0x14] sm:$0xf]
    %v490 = vld [vmem:[%s483 + $0x18] sm:$0xf]
    %v491 = vld [vmem:[%s483 + $0x1c] sm:$0xf]
    %v492 = vld [vmem:[%s483 + $0x20] sm:$0xf]
    %v493 = vld [vmem:[%s483 + $0x24] sm:$0xf]
    %v494 = vld [vmem:[%s483 + $0x28] sm:$0xf]
    %v495 = vld [vmem:[%s483 + $0x2c] sm:$0xf]
    %v496 = vld [vmem:[%s483 + $0x30] sm:$0xf]
    %v497 = vld [vmem:[%s483 + $0x34] sm:$0xf]
    %v498 = vld [vmem:[%s483 + $0x38] sm:$0xf]
    %v499 = vld [vmem:[%s483 + $0x3c] sm:$0xf]
    %s500 = scalar_lea.vmem %s6, %s120
    %v501 = vld [vmem:[%s500] sm:$0x1]
    %v503 = vlaneseq
    %v504 = vshrl.u32 %v503, 7
    %v505 = vsub.s32 0, %v504
    %v506 = vrot.slane %v501, %v505
    %v524 = vunpack.c.l.b16 %v484
    %v525 = vunpack.c.l.b16 %v485
    %v526 = vunpack.c.l.b16 %v486
    %v527 = vunpack.c.l.b16 %v487
    %v528 = vunpack.c.l.b16 %v488
    %v529 = vunpack.c.l.b16 %v489
    %v530 = vunpack.c.l.b16 %v490
    %v531 = vunpack.c.l.b16 %v491
    %v532 = vunpack.c.l.b16 %v492
    %v533 = vunpack.c.l.b16 %v493
    %v534 = vunpack.c.l.b16 %v494
    %v535 = vunpack.c.l.b16 %v495
    %v536 = vunpack.c.l.b16 %v496
    %v537 = vunpack.c.l.b16 %v497
    %v538 = vunpack.c.l.b16 %v498
    %v539 = vunpack.c.l.b16 %v499
    %v540 = vpack.c.b16 %v525, %v524
    %v541 = vpack.c.b16 %v527, %v526
    %v542 = vpack.c.b16 %v529, %v528
    %v543 = vpack.c.b16 %v531, %v530
    %v544 = vpack.c.b16 %v533, %v532
    %v545 = vpack.c.b16 %v535, %v534
    %v546 = vpack.c.b16 %v537, %v536
    %v547 = vpack.c.b16 %v539, %v538
    %556 = vmatprep.subr.bf16.mxu0 0
    %557 = vmatpush1.bf16.msra.mxu0 %v547
    %558 = vmatprep.subr.bf16.mxu0 0
    %559 = vmatpush1.bf16.msra.mxu0 %v546
    %560 = vmatprep.subr.bf16.mxu0 0
    %561 = vmatpush1.bf16.msra.mxu0 %v545
    %562 = vmatprep.subr.bf16.mxu0 0
    %563 = vmatpush1.bf16.msra.mxu0 %v544
    %564 = vmatprep.subr.bf16.mxu0 0
    %565 = vmatpush1.bf16.msra.mxu0 %v543
    %566 = vmatprep.subr.bf16.mxu0 0
    %567 = vmatpush1.bf16.msra.mxu0 %v542
    %568 = vmatprep.subr.bf16.mxu0 0
    %569 = vmatpush1.bf16.msra.mxu0 %v541
    %570 = vmatprep.subr.bf16.mxu0 0
    %571 = vmatpush1.bf16.msra.mxu0 %v540
    %572 = vmatprep.subr.bf16.mxu0 0
    %573 = vmatpush2.bf16.msra.mxu0 0
    %574 = vmatprep.subr.bf16.mxu0 0
    %575 = vmatpush2.bf16.msra.mxu0 0
    %576 = vmatprep.subr.bf16.mxu0 0
    %577 = vmatpush2.bf16.msra.mxu0 0
    %578 = vmatprep.subr.bf16.mxu0 0
    %579 = vmatpush2.bf16.msra.mxu0 0
    %580 = vmatprep.subr.bf16.mxu0 0
    %581 = vmatpush2.bf16.msra.mxu0 0
    %582 = vmatprep.subr.bf16.mxu0 0
    %583 = vmatpush2.bf16.msra.mxu0 0
    %584 = vmatprep.subr.bf16.mxu0 0
    %585 = vmatpush2.bf16.msra.mxu0 0
    %586 = vmatprep.subr.bf16.mxu0 0
    %587 = vmatpush2.bf16.msra.mxu0 0
    %588 = vmatprep.mubr.bf16.mxu0 0
    %589 = vmatmul.mubr.bf16.gmra.mxu0 %v474
    %v590 = vpop.f32.mrf.mxu0
    %v591 = vadd.f32 %v506, %v590
    %v592 = vpop.f32.mrf.mxu0
    %v593 = vpop.f32.mrf.mxu0
    %v594 = vadd.f32 %v506, %v593
    %v595 = vpop.f32.mrf.mxu0
    %596 = vmatprep.mubr.bf16.mxu0 0
    %597 = vmatmul.mubr.bf16.gmra.mxu0 %v475
    %v598 = vpop.f32.mrf.mxu0
    %v599 = vadd.f32 %v506, %v598
    %v600 = vpop.f32.mrf.mxu0
    %v601 = vpop.f32.mrf.mxu0
    %v602 = vadd.f32 %v506, %v601
    %v603 = vpop.f32.mrf.mxu0
    %604 = vmatprep.mubr.bf16.mxu0 0
    %605 = vmatmul.mubr.bf16.gmra.mxu0 %v476
    %v606 = vpop.f32.mrf.mxu0
    %v607 = vadd.f32 %v506, %v606
    %v608 = vpop.f32.mrf.mxu0
    %v609 = vpop.f32.mrf.mxu0
    %v610 = vadd.f32 %v506, %v609
    %v611 = vpop.f32.mrf.mxu0
    %612 = vmatprep.mubr.bf16.mxu0 0
    %613 = vmatmul.mubr.bf16.gmra.mxu0 %v477
    %v614 = vpop.f32.mrf.mxu0
    %v615 = vadd.f32 %v506, %v614
    %v616 = vpop.f32.mrf.mxu0
    %v617 = vpop.f32.mrf.mxu0
    %v618 = vadd.f32 %v506, %v617
    %v619 = vpop.f32.mrf.mxu0
    %620 = vmatprep.mubr.bf16.mxu0 0
    %621 = vmatmul.mubr.bf16.gmra.mxu0 %v478
    %v622 = vpop.f32.mrf.mxu0
    %v623 = vadd.f32 %v506, %v622
    %v624 = vpop.f32.mrf.mxu0
    %v625 = vpop.f32.mrf.mxu0
    %v626 = vadd.f32 %v506, %v625
    %v627 = vpop.f32.mrf.mxu0
    %628 = vmatprep.mubr.bf16.mxu0 0
    %629 = vmatmul.mubr.bf16.gmra.mxu0 %v479
    %v630 = vpop.f32.mrf.mxu0
    %v631 = vadd.f32 %v506, %v630
    %v632 = vpop.f32.mrf.mxu0
    %v633 = vpop.f32.mrf.mxu0
    %v634 = vadd.f32 %v506, %v633
    %v635 = vpop.f32.mrf.mxu0
    %636 = vmatprep.mubr.bf16.mxu0 0
    %637 = vmatmul.mubr.bf16.gmra.mxu0 %v480
    %v638 = vpop.f32.mrf.mxu0
    %v639 = vadd.f32 %v506, %v638
    %v640 = vpop.f32.mrf.mxu0
    %v641 = vpop.f32.mrf.mxu0
    %v642 = vadd.f32 %v506, %v641
    %v643 = vpop.f32.mrf.mxu0
    %644 = vmatprep.mubr.bf16.mxu0 0
    %645 = vmatmul.mubr.bf16.gmra.mxu0 %v481
    %v646 = vpop.f32.mrf.mxu0
    %v647 = vadd.f32 %v506, %v646
    %v648 = vpop.f32.mrf.mxu0
    %v649 = vpop.f32.mrf.mxu0
    %v650 = vadd.f32 %v506, %v649
    %v651 = vpop.f32.mrf.mxu0
    %652 = vdwg.mxu0
    %v653 = vmax.f32 %v591, 0.0
    %v654 = vmax.f32 %v594, 0.0
    %v655 = vmax.f32 %v599, 0.0
    %v656 = vmax.f32 %v602, 0.0
    %v657 = vmax.f32 %v607, 0.0
    %v658 = vmax.f32 %v610, 0.0
    %v659 = vmax.f32 %v615, 0.0
    %v660 = vmax.f32 %v618, 0.0
    %v661 = vmax.f32 %v623, 0.0
    %v662 = vmax.f32 %v626, 0.0
    %v663 = vmax.f32 %v631, 0.0
    %v664 = vmax.f32 %v634, 0.0
    %v665 = vmax.f32 %v639, 0.0
    %v666 = vmax.f32 %v642, 0.0
    %v667 = vmax.f32 %v647, 0.0
    %v668 = vmax.f32 %v650, 0.0
    %v669 = vpack.c.bf16 %v654, %v653
    %v670 = vpack.c.bf16 %v656, %v655
    %v671 = vpack.c.bf16 %v658, %v657
    %v672 = vpack.c.bf16 %v660, %v659
    %v673 = vpack.c.bf16 %v662, %v661
    %v674 = vpack.c.bf16 %v664, %v663
    %v675 = vpack.c.bf16 %v666, %v665
    %v676 = vpack.c.bf16 %v668, %v667
  $region50: #{gin_forward.1} parent=0 // loop_footer
    %s124 = sadd.s32 1, %s120
  $region51: #{gin_forward.1} parent=0 // loop_footer_branch
    %119 = sbr.rel target = $region47
  $region52: #{gin_forward.1} parent=0 // loop_exit
    _
  %v677 = vld [vmem:[%s1] sm:$0xf]
  %678 = vmatprep.subr.bf16.mxu0 0
  %679 = vmatpush1.bf16.msra.mxu0 %v132
  %680 = vmatprep.subr.bf16.mxu0 0
  %681 = vmatpush1.bf16.msra.mxu0 %v131
  %682 = vmatprep.subr.bf16.mxu0 0
  %683 = vmatpush1.bf16.msra.mxu0 %v130
  %684 = vmatprep.subr.bf16.mxu0 0
  %685 = vmatpush1.bf16.msra.mxu0 %v129
  %686 = vmatprep.subr.bf16.mxu0 0
  %687 = vmatpush1.bf16.msra.mxu0 %v128
  %688 = vmatprep.subr.bf16.mxu0 0
  %689 = vmatpush1.bf16.msra.mxu0 %v127
  %690 = vmatprep.subr.bf16.mxu0 0
  %691 = vmatpush1.bf16.msra.mxu0 %v126
  %692 = vmatprep.subr.bf16.mxu0 0
  %693 = vmatpush1.bf16.msra.mxu0 %v125
  %694 = vmatprep.subr.bf16.mxu0 0
  %695 = vmatpush2.bf16.msra.mxu0 0
  %696 = vmatprep.subr.bf16.mxu0 0
  %697 = vmatpush2.bf16.msra.mxu0 0
  %698 = vmatprep.subr.bf16.mxu0 0
  %699 = vmatpush2.bf16.msra.mxu0 0
  %700 = vmatprep.subr.bf16.mxu0 0
  %701 = vmatpush2.bf16.msra.mxu0 0
  %702 = vmatprep.subr.bf16.mxu0 0
  %703 = vmatpush2.bf16.msra.mxu0 0
  %704 = vmatprep.subr.bf16.mxu0 0
  %705 = vmatpush2.bf16.msra.mxu0 0
  %706 = vmatprep.subr.bf16.mxu0 0
  %707 = vmatpush2.bf16.msra.mxu0 0
  %708 = vmatprep.subr.bf16.mxu0 0
  %709 = vmatpush2.bf16.msra.mxu0 0
  %710 = vmatprep.mubr.bf16.mxu0 0
  %711 = vmatmul.mubr.bf16.gmra.mxu0 %v677
  %v712 = vpop.f32.mrf.mxu0
  %v713 = vadd.f32 0.0, %v712
  %v714 = vpop.f32.mrf.mxu0
  %v715 = vpop.f32.mrf.mxu0
  %v716 = vpop.f32.mrf.mxu0
  %717 = vdwg.mxu0
  %v718 = vpack.c.bf16 %v713, %v713
  %v719 = vld [vmem:[%s7] sm:$0xf]
  %v720 = vld [vmem:[%s7 + $0x4] sm:$0xf]
  %v721 = vld [vmem:[%s7 + $0x8] sm:$0xf]
  %v722 = vld [vmem:[%s7 + $0xc] sm:$0xf]
  %v723 = vld [vmem:[%s7 + $0x10] sm:$0xf]
  %v724 = vld [vmem:[%s7 + $0x14] sm:$0xf]
  %v725 = vld [vmem:[%s7 + $0x18] sm:$0xf]
  %v726 = vld [vmem:[%s7 + $0x1c] sm:$0xf]
  %v727 = vld [vmem:[%s7 + $0x20] sm:$0xf]
  %v728 = vld [vmem:[%s7 + $0x24] sm:$0xf]
  %v729 = vld [vmem:[%s7 + $0x28] sm:$0xf]
  %v730 = vld [vmem:[%s7 + $0x2c] sm:$0xf]
  %v731 = vld [vmem:[%s7 + $0x30] sm:$0xf]
  %v732 = vld [vmem:[%s7 + $0x34] sm:$0xf]
  %v733 = vld [vmem:[%s7 + $0x38] sm:$0xf]
  %v734 = vld [vmem:[%s7 + $0x3c] sm:$0xf]
  %v735 = vld [vmem:[%s8] sm:$0x1]
  %v737 = vlaneseq
  %v738 = vshrl.u32 %v737, 7
  %v739 = vsub.s32 0, %v738
  %v740 = vrot.slane %v735, %v739
  %v758 = vunpack.c.l.b16 %v719
  %v759 = vunpack.c.l.b16 %v720
  %v760 = vunpack.c.l.b16 %v721
  %v761 = vunpack.c.l.b16 %v722
  %v762 = vunpack.c.l.b16 %v723
  %v763 = vunpack.c.l.b16 %v724
  %v764 = vunpack.c.l.b16 %v725
  %v765 = vunpack.c.l.b16 %v726
  %v766 = vunpack.c.l.b16 %v727
  %v767 = vunpack.c.l.b16 %v728
  %v768 = vunpack.c.l.b16 %v729
  %v769 = vunpack.c.l.b16 %v730
  %v770 = vunpack.c.l.b16 %v731
  %v771 = vunpack.c.l.b16 %v732
  %v772 = vunpack.c.l.b16 %v733
  %v773 = vunpack.c.l.b16 %v734
  %v774 = vpack.c.b16 %v759, %v758
  %v775 = vpack.c.b16 %v761, %v760
  %v776 = vpack.c.b16 %v763, %v762
  %v777 = vpack.c.b16 %v765, %v764
  %v778 = vpack.c.b16 %v767, %v766
  %v779 = vpack.c.b16 %v769, %v768
  %v780 = vpack.c.b16 %v771, %v770
  %v781 = vpack.c.b16 %v773, %v772
  %790 = vmatprep.subr.bf16.mxu0 0
  %791 = vmatpush1.bf16.msra.mxu0 %v781
  %792 = vmatprep.subr.bf16.mxu0 0
  %793 = vmatpush1.bf16.msra.mxu0 %v780
  %794 = vmatprep.subr.bf16.mxu0 0
  %795 = vmatpush1.bf16.msra.mxu0 %v779
  %796 = vmatprep.subr.bf16.mxu0 0
  %797 = vmatpush1.bf16.msra.mxu0 %v778
  %798 = vmatprep.subr.bf16.mxu0 0
  %799 = vmatpush1.bf16.msra.mxu0 %v777
  %800 = vmatprep.subr.bf16.mxu0 0
  %801 = vmatpush1.bf16.msra.mxu0 %v776
  %802 = vmatprep.subr.bf16.mxu0 0
  %803 = vmatpush1.bf16.msra.mxu0 %v775
  %804 = vmatprep.subr.bf16.mxu0 0
  %805 = vmatpush1.bf16.msra.mxu0 %v774
  %806 = vmatprep.subr.bf16.mxu0 0
  %807 = vmatpush2.bf16.msra.mxu0 0
  %808 = vmatprep.subr.bf16.mxu0 0
  %809 = vmatpush2.bf16.msra.mxu0 0
  %810 = vmatprep.subr.bf16.mxu0 0
  %811 = vmatpush2.bf16.msra.mxu0 0
  %812 = vmatprep.subr.bf16.mxu0 0
  %813 = vmatpush2.bf16.msra.mxu0 0
  %814 = vmatprep.subr.bf16.mxu0 0
  %815 = vmatpush2.bf16.msra.mxu0 0
  %816 = vmatprep.subr.bf16.mxu0 0
  %817 = vmatpush2.bf16.msra.mxu0 0
  %818 = vmatprep.subr.bf16.mxu0 0
  %819 = vmatpush2.bf16.msra.mxu0 0
  %820 = vmatprep.subr.bf16.mxu0 0
  %821 = vmatpush2.bf16.msra.mxu0 0
  %822 = vmatprep.mubr.bf16.mxu0 0
  %823 = vmatmul.mubr.bf16.gmra.mxu0 %v718
  %v824 = vpop.f32.mrf.mxu0
  %v825 = vadd.f32 %v740, %v824
  %v826 = vpop.f32.mrf.mxu0
  %v827 = vpop.f32.mrf.mxu0
  %v828 = vpop.f32.mrf.mxu0
  %829 = vdwg.mxu0
  %v830 = vmax.f32 %v825, 0.0
  %v831 = vpack.c.bf16 %v830, %v830
  %v832 = vld [vmem:[%s9] sm:$0xf]
  %v833 = vld [vmem:[%s9 + $0x4] sm:$0xf]
  %v834 = vld [vmem:[%s9 + $0x8] sm:$0xf]
  %v835 = vld [vmem:[%s9 + $0xc] sm:$0xf]
  %v836 = vld [vmem:[%s9 + $0x10] sm:$0xf]
  %v837 = vld [vmem:[%s9 + $0x14] sm:$0xf]
  %v838 = vld [vmem:[%s9 + $0x18] sm:$0xf]
  %v839 = vld [vmem:[%s9 + $0x1c] sm:$0xf]
  %v840 = vld [vmem:[%s9 + $0x20] sm:$0xf]
  %v841 = vld [vmem:[%s9 + $0x24] sm:$0xf]
  %v842 = vld [vmem:[%s9 + $0x28] sm:$0xf]
  %v843 = vld [vmem:[%s9 + $0x2c] sm:$0xf]
  %v844 = vld [vmem:[%s9 + $0x30] sm:$0xf]
  %v845 = vld [vmem:[%s9 + $0x34] sm:$0xf]
  %v846 = vld [vmem:[%s9 + $0x38] sm:$0xf]
  %v847 = vld [vmem:[%s9 + $0x3c] sm:$0xf]
  %v848 = vld [vmem:[%s10] sm:$0x1]
  %v850 = vlaneseq
  %v851 = vshrl.u32 %v850, 7
  %v852 = vsub.s32 0, %v851
  %v853 = vrot.slane %v848, %v852
  %v871 = vunpack.c.l.b16 %v832
  %v872 = vunpack.c.l.b16 %v833
  %v873 = vunpack.c.l.b16 %v834
  %v874 = vunpack.c.l.b16 %v835
  %v875 = vunpack.c.l.b16 %v836
  %v876 = vunpack.c.l.b16 %v837
  %v877 = vunpack.c.l.b16 %v838
  %v878 = vunpack.c.l.b16 %v839
  %v879 = vunpack.c.l.b16 %v840
  %v880 = vunpack.c.l.b16 %v841
  %v881 = vunpack.c.l.b16 %v842
  %v882 = vunpack.c.l.b16 %v843
  %v883 = vunpack.c.l.b16 %v844
  %v884 = vunpack.c.l.b16 %v845
  %v885 = vunpack.c.l.b16 %v846
  %v886 = vunpack.c.l.b16 %v847
  %v887 = vpack.c.b16 %v872, %v871
  %v888 = vpack.c.b16 %v874, %v873
  %v889 = vpack.c.b16 %v876, %v875
  %v890 = vpack.c.b16 %v878, %v877
  %v891 = vpack.c.b16 %v880, %v879
  %v892 = vpack.c.b16 %v882, %v881
  %v893 = vpack.c.b16 %v884, %v883
  %v894 = vpack.c.b16 %v886, %v885
  %903 = vmatprep.subr.bf16.mxu0 0
  %904 = vmatpush1.bf16.msra.mxu0 %v894
  %905 = vmatprep.subr.bf16.mxu0 0
  %906 = vmatpush1.bf16.msra.mxu0 %v893
  %907 = vmatprep.subr.bf16.mxu0 0
  %908 = vmatpush1.bf16.msra.mxu0 %v892
  %909 = vmatprep.subr.bf16.mxu0 0
  %910 = vmatpush1.bf16.msra.mxu0 %v891
  %911 = vmatprep.subr.bf16.mxu0 0
  %912 = vmatpush1.bf16.msra.mxu0 %v890
  %913 = vmatprep.subr.bf16.mxu0 0
  %914 = vmatpush1.bf16.msra.mxu0 %v889
  %915 = vmatprep.subr.bf16.mxu0 0
  %916 = vmatpush1.bf16.msra.mxu0 %v888
  %917 = vmatprep.subr.bf16.mxu0 0
  %918 = vmatpush1.bf16.msra.mxu0 %v887
  %919 = vmatprep.subr.bf16.mxu0 0
  %920 = vmatpush2.bf16.msra.mxu0 0
  %921 = vmatprep.subr.bf16.mxu0 0
  %922 = vmatpush2.bf16.msra.mxu0 0
  %923 = vmatprep.subr.bf16.mxu0 0
  %924 = vmatpush2.bf16.msra.mxu0 0
  %925 = vmatprep.subr.bf16.mxu0 0
  %926 = vmatpush2.bf16.msra.mxu0 0
  %927 = vmatprep.subr.bf16.mxu0 0
  %928 = vmatpush2.bf16.msra.mxu0 0
  %929 = vmatprep.subr.bf16.mxu0 0
  %930 = vmatpush2.bf16.msra.mxu0 0
  %931 = vmatprep.subr.bf16.mxu0 0
  %932 = vmatpush2.bf16.msra.mxu0 0
  %933 = vmatprep.subr.bf16.mxu0 0
  %934 = vmatpush2.bf16.msra.mxu0 0
  %935 = vmatprep.mubr.bf16.mxu0 0
  %936 = vmatmul.mubr.bf16.gmra.mxu0 %v831
  %v937 = vpop.f32.mrf.mxu0
  %v938 = vadd.f32 %v853, %v937
  %v939 = vpop.f32.mrf.mxu0
  %v940 = vpop.f32.mrf.mxu0
  %v941 = vpop.f32.mrf.mxu0
  %942 = vdwg.mxu0
  %943 = vst [vmem:[%s11] sm:$0xff] %v938
  // Predicated region
  $region53: #{gin_forward.1} parent=0 // pred_check
    _
  $region54: #{gin_forward.1} parent=0 // pred_check_branch
    %945 = sbr.rel (0) target = $region56
  $region55: #{gin_forward.1} parent=0 // pred_region
    _
  $region56: #{gin_forward.1} parent=0 // pred_fallthru
    _
  // Predicated region
  $region57: #{gin_forward.1} parent=0 // pred_check
    _
  $region58: #{gin_forward.1} parent=0 // pred_check_branch
    %947 = sbr.rel (0) target = $region60
  $region59: #{gin_forward.1} parent=0 // pred_region
    _
  $region60: #{gin_forward.1} parent=0 // pred_fallthru
    _

</llo_original>
